<compile_context>
chip_gen: v5e
topology: v5e:2x2
jax: 0.10.0
libtpu: 0.0.40
codegen_flags: <defaults>
</compile_context>

<pallas_src>
import jax
import jax.numpy as jnp
from jax.experimental import pallas as pl
from jax.experimental.pallas import tpu as pltpu

BITS_OUT = 8                        # kwargs['bits_out']
QMAX = float(2 ** BITS_OUT - 1)     # uint quantization range (post-ReLU)

TILE_ROWS = 512                     # sublane-dim tile (multiple of 8 when tiled)
LANES = 1024                        # lane-dense last dim (multiple of 128)
_VMEM_LIMIT = 32 * 1024 * 1024


def _global_max_kernel(x_ref, m_ref):
    """Accumulate max(ReLU(x)) over all tiles into a resident (1,1) output block."""
    @pl.when(pl.program_id(0) == 0)
    def _():
        # init to 0: max(ReLU(x)) == max(max(x), 0), so the ReLU clamp is folded in.
        m_ref[...] = jnp.zeros_like(m_ref)

    t = jnp.max(x_ref[...], axis=(0, 1), keepdims=True).astype(jnp.float32)
    m_ref[...] = jnp.maximum(m_ref[...], t)


def _relu_quant_kernel(scl_ref, x_ref, o_ref):
    """ReLU + unsigned fake-quant with a precomputed scale from SMEM."""
    x = x_ref[...]
    scale = scl_ref[0].astype(x.dtype)       # scale
    inv_scale = scl_ref[1].astype(x.dtype)   # 1/scale (0 if scale == 0)
    y = jnp.maximum(x, 0.0)                                   # nn.ReLU
    q = jnp.minimum(jnp.round(y * inv_scale),
                    jnp.asarray(QMAX, dtype=x.dtype))         # lower clip redundant
    o_ref[...] = (q * scale).astype(o_ref.dtype)


def activation_module_wrapper_post(x: jax.Array) -> jax.Array:
    """Forward of ActivationModuleWrapperPost(name, nn.ReLU(), bits_out=8,
    qtype='max_static') on an NCHW activation tensor."""
    orig_shape = x.shape
    dtype = x.dtype
    total = x.size

    # Flatten to a lane-dense (rows, LANES) slab.  Zero padding is harmless: zeros
    # do not change the post-ReLU max, and padded outputs are sliced off below.
    rows = -(-total // LANES)
    tile_rows = min(TILE_ROWS, rows)
    rows_padded = -(-rows // tile_rows) * tile_rows
    padded_total = rows_padded * LANES

    flat = x.reshape(-1)
    if padded_total != total:
        flat = jnp.pad(flat, (0, padded_total - total))
    slab = flat.reshape(rows_padded, LANES)
    num_tiles = rows_padded // tile_rows

    # ---- pass 1: global max of ReLU(x) -------------------------------------------
    gmax = pl.pallas_call(
        _global_max_kernel,
        out_shape=jax.ShapeDtypeStruct((1, 1), jnp.float32),
        grid=(num_tiles,),
        in_specs=[pl.BlockSpec((tile_rows, LANES), lambda i: (i, 0))],
        out_specs=pl.BlockSpec((1, 1), lambda i: (0, 0)),     # resident accumulator
        compiler_params=pltpu.CompilerParams(
            dimension_semantics=("arbitrary",),
            vmem_limit_bytes=_VMEM_LIMIT),
    )(slab)

    # scale / inverse computed once on the scalar path (not per tile / per element)
    m = jnp.maximum(gmax[0, 0], 0.0)
    scale = m / QMAX
    inv_scale = jnp.where(scale > 0.0, 1.0 / scale, 0.0)
    scalars = jnp.stack([scale, inv_scale]).astype(jnp.float32)

    # ---- pass 2: elementwise ReLU + uint fake-quant -------------------------------
    out_slab = pl.pallas_call(
        _relu_quant_kernel,
        out_shape=jax.ShapeDtypeStruct(slab.shape, dtype),
        grid=(num_tiles,),
        in_specs=[
            pl.BlockSpec(memory_space=pltpu.MemorySpace.SMEM),      # [scale, 1/scale]
            pl.BlockSpec((tile_rows, LANES), lambda i: (i, 0)),
        ],
        out_specs=pl.BlockSpec((tile_rows, LANES), lambda i: (i, 0)),
        compiler_params=pltpu.CompilerParams(
            dimension_semantics=("parallel",),   # v7x: shard row tiles across 2 TCs
            vmem_limit_bytes=_VMEM_LIMIT),
    )(scalars, slab)
    # NOTE: input_output_aliases={1: 0} would reuse the slab's HBM buffer, but in
    # eager/test use the input is still live and XLA would insert a defensive copy,
    # so it is intentionally omitted here.

    return out_slab.reshape(-1)[:total].reshape(orig_shape)


def _reference(x: jax.Array) -> jax.Array:
    """Pure-JAX reference of the same forward, for sanity checking."""
    y = jnp.maximum(x, 0.0)
    m = jnp.max(y).astype(jnp.float32)
    scale = m / QMAX
    inv = jnp.where(scale > 0.0, 1.0 / scale, 0.0)
    q = jnp.minimum(jnp.round(y * inv.astype(x.dtype)),
                    jnp.asarray(QMAX, dtype=x.dtype))
    return (q * scale.astype(x.dtype)).astype(x.dtype)


if __name__ == "__main__":
    key = jax.random.PRNGKey(0)
    # small NCHW activation: batch=2, channels=4, spatial=16x16
    x = jax.random.normal(key, (2, 4, 16, 16), dtype=jnp.float32)

    out = activation_module_wrapper_post(x)
    out = jax.block_until_ready(out)

    ref = _reference(x)
    assert out.shape == x.shape and out.dtype == x.dtype
    assert jnp.allclose(out, ref, atol=1e-5, rtol=1e-5)

    print("KERNEL_OK")
</pallas_src>

<mosaic_0001>
module attributes {stable_mosaic.version = 11 : i64} {
  func.func @_global_max_kernel(%arg0: i32, %arg1: memref<2x1024xf32, #tpu.memory_space<vmem>>, %arg2: memref<1x1xf32, #tpu.memory_space<vmem>>) attributes {dimension_semantics = [#tpu.dimension_semantics<arbitrary>], iteration_bounds = array<i64: 1>, scalar_prefetch = 0 : i64, scratch_operands = 0 : i64, tpu.core_type = #tpu.core_type<tc>, window_params = [{transform_indices = @transform_0, window_bounds = array<i64: 2, 1024>}, {pipeline_mode = #tpu.pipeline_mode<synchronous>, transform_indices = @transform_1, window_bounds = array<i64: 1, 1>}]} {
    %c0_i32 = arith.constant 0 : i32
    %0 = arith.cmpi eq, %arg0, %c0_i32 : i32
    %1 = arith.extui %0 : i1 to i32
    %c0_i32_0 = arith.constant 0 : i32
    %2 = arith.cmpi ne, %1, %c0_i32_0 : i32
    scf.if %2 {
      %cst_6 = arith.constant 0.000000e+00 : f32
      %12 = vector.broadcast %cst_6 : f32 to vector<1x1xf32>
      %c0_7 = arith.constant 0 : index
      %c0_8 = arith.constant 0 : index
      %13 = vector.load %arg2[%c0_7, %c0_8] : memref<1x1xf32, #tpu.memory_space<vmem>>, vector<1x1xf32>
      tpu.vector_store %arg2[%c0_7, %c0_8], %12 {strides = array<i32>} : memref<1x1xf32, #tpu.memory_space<vmem>>, vector<1x1xf32>,
    } else {
    }
    %c0 = arith.constant 0 : index
    %c0_1 = arith.constant 0 : index
    %3 = vector.load %arg1[%c0, %c0_1] : memref<2x1024xf32, #tpu.memory_space<vmem>>, vector<2x1024xf32>
    %4 = vector.shape_cast %3 : vector<2x1024xf32> to vector<1x2x1024xf32>
    %cst = arith.constant dense<0xFF800000> : vector<1xf32>
    %5 = vector.multi_reduction <maximumf>, %4, %cst [1, 2] : vector<1x2x1024xf32> to vector<1xf32>
    %6 = vector.shape_cast %5 : vector<1xf32> to vector<1x1x1xf32>
    %7 = vector.extract %6[0, 0, 0] : f32 from vector<1x1x1xf32>
    %8 = vector.broadcast %7 : f32 to vector<1x1xf32>
    %c0_2 = arith.constant 0 : index
    %c0_3 = arith.constant 0 : index
    %9 = vector.load %arg2[%c0_2, %c0_3] : memref<1x1xf32, #tpu.memory_space<vmem>>, vector<1x1xf32>
    %10 = arith.maximumf %9, %8 : vector<1x1xf32>
    %c0_4 = arith.constant 0 : index
    %c0_5 = arith.constant 0 : index
    %11 = vector.load %arg2[%c0_4, %c0_5] : memref<1x1xf32, #tpu.memory_space<vmem>>, vector<1x1xf32>
    tpu.vector_store %arg2[%c0_4, %c0_5], %10 {strides = array<i32>} : memref<1x1xf32, #tpu.memory_space<vmem>>, vector<1x1xf32>,
    return
  }
  func.func @transform_0(%arg0: i32) -> (i32, i32) {
    %c0_i32 = arith.constant 0 : i32
    %c0_i32_0 = arith.constant 0 : i32
    return %arg0, %c0_i32 : i32, i32
  }
  func.func @transform_1(%arg0: i32) -> (i32, i32) {
    %c0_i32 = arith.constant 0 : i32
    %c0_i32_0 = arith.constant 0 : i32
    %c0_i32_1 = arith.constant 0 : i32
    return %c0_i32, %c0_i32_0 : i32, i32
  }
}

</mosaic_0001>

<llo_original>
// kernel: tpu_custom_call.1
$region0: #{tpu_custom_call.1}
  #allocation0 [shape = 'u32[]', space=smem, size = 0x4, offset = 0x4, fixed_abs, tag = 'smem constant byte address 0x4 - core index']
  #allocation1 [shape = 'u32[72,128]{1,0:T(1,128)}', space=vmem, size = 0x9000, scoped, tag = 'internal scratch']
  %s0 = inlined_call_operand.hbm [shape: f32[2,1024], index: 0, kind: input, shape index: {}]
  %s1 = inlined_call_operand.hbm [shape: f32[1,1], index: 1, kind: output, shape index: {}]
  %s2 = sld [smem:[#allocation0]]
  $region22: #{tpu_custom_call.1} parent=0
    _
  %s4 = ssub.s32 1, %s2
  %s5 = scalar_select 0, %s4, %s2
  $region1: #{tpu_custom_call.1} parent=0
    #allocation2 [shape = 'u8[8192]{0}', space=vmem, size = 0x2000, scoped, tag = 'input window, operand 0, single buffered']
    #allocation3 [shape = 's32[1]{0}', space=sflag, size = 0x4, scoped, tag = 'scoped memory for tpu_custom_call.1']
    #allocation4 [shape = 's32[1]{0}', space=sflag, size = 0x4, scoped, tag = 'scoped memory for tpu_custom_call.1']
    #allocation5 [shape = 'u8[512]{0}', space=vmem, size = 0x400, scoped, tag = 'output window, operand 0, single buffered']
    %6 = vsyncpa [#allocation3], 0
    %7 = vsyncpa [#allocation4], 0
    // Predicated region
    $region2: #{tpu_custom_call.1} parent=1 // pred_check
      _
    $region3: #{tpu_custom_call.1} parent=1 // pred_check_branch
      %9 = sbr.rel (0) target = $region5
    $region4: #{tpu_custom_call.1} parent=1 // pred_region
      %11 = vsyncadd [#allocation3], 0
      %s13 = sshll.u32 %s0, 4
      %s14 = int_to_ptr.hbm [resolvable:$true] %s13
      %s15 = sshll.u32 [#allocation2], 4
      %s16 = int_to_ptr.vmem [resolvable:$true] %s15
      %18 = dma.hbm_to_vmem [thread:$0]  %s14, 256, %s16, [#allocation3]
    $region5: #{tpu_custom_call.1} parent=1 // pred_fallthru
      _
    // Predicated region
    $region6: #{tpu_custom_call.1} parent=1 // pred_check
      _
    $region7: #{tpu_custom_call.1} parent=1 // pred_check_branch
      %20 = sbr.rel (0) target = $region9
    $region8: #{tpu_custom_call.1} parent=1 // pred_region
      %22 = dma.done [#allocation3], 256
    $region9: #{tpu_custom_call.1} parent=1 // pred_fallthru
      _
    %p23 = scmp.eq.s32.totalorder 0, 0
    // Predicated region
    $region10: #{tpu_custom_call.1} parent=1 // pred_check
      %p24 = pneg %p23
    $region11: #{tpu_custom_call.1} parent=1 // pred_check_branch
      %26 = sbr.rel (%p24) target = $region13
    $region12: #{tpu_custom_call.1} parent=1 // pred_region
      %vm27 = vcmask 0
      %28 = vst.msk [vmem:[#allocation5] sm:$0x1] %vm27, 0.0
    $region13: #{tpu_custom_call.1} parent=1 // pred_fallthru
      _
    %v29 = vld [vmem:[#allocation2] sm:$0xff]
    %v30 = vld [vmem:[#allocation2 + $0x8] sm:$0xff]
    %33 = vst [vmem:[#allocation1] ss:$4 sm:$0xff] %v29
    %s34 = scalar_lea.vmem [#allocation1], 32
    %35 = vst [vmem:[%s34] ss:$4 sm:$0xff] %v30
    %v36 = vld.sshfl [vmem:[#allocation1] sm:$0xff pattern:$0x73625140]
    %v37 = vld.sshfl [vmem:[#allocation1 + $0x8] sm:$0xff pattern:$0x73625140]
    %v38 = vld.sshfl [vmem:[#allocation1 + $0x10] sm:$0xff pattern:$0x73625140]
    %v39 = vld.sshfl [vmem:[#allocation1 + $0x18] sm:$0xff pattern:$0x73625140]
    %v40 = vld.sshfl [vmem:[#allocation1 + $0x20] sm:$0xff pattern:$0x73625140]
    %v41 = vld.sshfl [vmem:[#allocation1 + $0x28] sm:$0xff pattern:$0x73625140]
    %v42 = vld.sshfl [vmem:[#allocation1 + $0x30] sm:$0xff pattern:$0x73625140]
    %v43 = vld.sshfl [vmem:[#allocation1 + $0x38] sm:$0xff pattern:$0x73625140]
    %vm52 = vcmask 1041408
    %v53 = vsel %vm52, %v36, -inf
    %v54 = vsel %vm52, %v37, -inf
    %v55 = vsel %vm52, %v38, -inf
    %v56 = vsel %vm52, %v39, -inf
    %v57 = vsel %vm52, %v40, -inf
    %v58 = vmax.f32 %v53, %v57
    %v59 = vsel %vm52, %v41, -inf
    %v60 = vmax.f32 %v54, %v59
    %v61 = vsel %vm52, %v42, -inf
    %v62 = vmax.f32 %v55, %v61
    %v63 = vsel %vm52, %v43, -inf
    %v64 = vmax.f32 %v56, %v63
    %v65 = vmax.f32 %v58, %v60
    %v66 = vmax.f32 %v62, %v64
    %v67 = vmax.f32 %v65, %v66
    %68 = vmax.xlane.f32.xlu0 %v67
    %v69 = vpop.xlane.xlu0 %68
    %v70 = vrot.slane %v69, 4
    %v71 = vmax.f32 %v69, %v70
    %v72 = vrot.slane %v71, 2
    %v73 = vmax.f32 %v71, %v72
    %v74 = vrot.slane %v73, 1
    %v75 = vmax.f32 %v73, %v74
    %s76 = vtos %v75
    %v77 = vstv %s76
    %v78 = vld [vmem:[#allocation5] sm:$0x1]
    %v79 = vmax.f32 %v78, %v77
    %vm80 = vcmask 0
    %81 = vst.msk [vmem:[#allocation5] sm:$0x1] %vm80, %v79
    // Predicated region
    $region14: #{tpu_custom_call.1} parent=1 // pred_check
      _
    $region15: #{tpu_custom_call.1} parent=1 // pred_check_branch
      %83 = sbr.rel (0) target = $region17
    $region16: #{tpu_custom_call.1} parent=1 // pred_region
      %85 = vsyncadd [#allocation4], 0
      %s87 = sshll.u32 [#allocation5], 4
      %s88 = int_to_ptr.vmem [resolvable:$true] %s87
      %s89 = sshll.u32 %s1, 4
      %s90 = int_to_ptr.hbm [resolvable:$true] %s89
      %92 = dma.vmem_to_hbm [thread:$0]  %s88, 16, %s90, [#allocation4]
    $region17: #{tpu_custom_call.1} parent=1 // pred_fallthru
      _
    // Predicated region
    $region18: #{tpu_custom_call.1} parent=1 // pred_check
      _
    $region19: #{tpu_custom_call.1} parent=1 // pred_check_branch
      %94 = sbr.rel (0) target = $region21
    $region20: #{tpu_custom_call.1} parent=1 // pred_region
      %96 = dma.done [#allocation4], 16
    $region21: #{tpu_custom_call.1} parent=1 // pred_fallthru
      _
    %97 = vsyncpa [#allocation3], 1
    %98 = vsyncpa [#allocation4], 1

</llo_original>
